<compile_context>
chip_gen: v7x
topology: tpu7x:2x2x1
jax: 0.10.0
libtpu: 0.0.40
codegen_flags: <defaults>
</compile_context>

<pallas_src>
from functools import partial

import jax
import jax.numpy as jnp
import numpy as np
from jax import lax
from jax.experimental import pallas as pl
from jax.experimental.pallas import tpu as pltpu


def conv_block_kernel(x_ref, w_ref, g_ref, b_ref, o_ref, *,
                      n_taps: int, pool_len: int, even_len: int,
                      n_stat: int, eps: float):
    """One Cout-tile of the fused block.

    x_ref : (2, B, Cin, Mp)  bf16  even/odd polyphase of the zero-padded input
    w_ref : (K, CT, Cin)     bf16  conv weights, tap-major
    g_ref : (CT, 1)          f32   BN gamma
    b_ref : (CT, 1)          f32   BN beta
    o_ref : (B, CT, Lh)      f32   pooled output tile (Lh = Lout // 2)
    """
    x = x_ref[...]                       # (2, B, Cin, Mp)
    w = w_ref[...]                       # (K, CT, Cin)
    _, B, Cin, _ = x.shape
    CT = w.shape[1]

    # Hoisted broadcast of the (tiny) weights to the batch dim so each tap is a
    # single batched MXU matmul contracting Cin (canonical NN form, f32 accum).
    wb = jnp.broadcast_to(w[:, None], (n_taps, B, CT, Cin))
    dn = (((2,), (1,)), ((0,), (0,)))    # contract Cin; batch over B

    # --- Conv1d as K accumulating matmuls over tap-shifted polyphase views.
    # Even output position 2j uses tap k at phase k%2, offset k//2;
    # odd position 2j+1 uses phase (k+1)%2, offset (k+1)//2.  All slices are
    # contiguous, so MaxPool1d(2) becomes an elementwise max of the two halves.
    # Conv bias is omitted: train-mode BN mean subtraction cancels it exactly.
    y_even = jnp.zeros((B, CT, even_len), jnp.float32)   # includes trailing odd pos
    y_odd = jnp.zeros((B, CT, pool_len), jnp.float32)
    for k in range(n_taps):
        wk = wb[k]                                             # (B, CT, Cin)
        xe = x[k % 2, :, :, k // 2:k // 2 + even_len]          # (B, Cin, even_len)
        xo = x[(k + 1) % 2, :, :, (k + 1) // 2:(k + 1) // 2 + pool_len]
        y_even = y_even + lax.dot_general(wk, xe, dn,
                                          preferred_element_type=jnp.float32)
        y_odd = y_odd + lax.dot_general(wk, xo, dn,
                                        preferred_element_type=jnp.float32)

    # --- BatchNorm1d (training mode, biased batch stats) in a single pass:
    # sum and sum-of-squares together; var = E[y^2] - mean^2 (mild f32 cancellation
    # risk for large-mean activations; fine for post-conv activations).
    def chan_sum(a):                      # (B, CT, L) -> (1, CT, 1)
        return jnp.sum(jnp.sum(a, axis=2, keepdims=True), axis=0, keepdims=True)

    inv_n = 1.0 / float(n_stat)
    s1 = chan_sum(y_even) + chan_sum(y_odd)
    s2 = chan_sum(y_even * y_even) + chan_sum(y_odd * y_odd)
    mean = s1 * inv_n
    var = jnp.maximum(s2 * inv_n - mean * mean, 0.0)
    scale = g_ref[...][None] * lax.rsqrt(var + eps)            # (1, CT, 1)
    shift = b_ref[...][None] - mean * scale

    # Normalize BEFORE the max (gamma may be negative); ELU AFTER the max
    # (ELU is monotone, halving the exp work).
    z_even = y_even[..., :pool_len] * scale + shift            # drop trailing pos
    z_odd = y_odd * scale + shift
    pooled = jnp.maximum(z_even, z_odd)
    # exp() in the dead branch can overflow to inf for large positives; benign
    # under select semantics -- do not "fix" with a clamp.
    o_ref[...] = jnp.where(pooled > 0, pooled, jnp.exp(pooled) - 1.0)


def conv_block_1d(x, w, bias, gamma, beta, *, padding: int, eps: float = 1e-5,
                  mxu_dtype=jnp.bfloat16):
    """x: (B, Cin, L), w: (Cout, Cin, K).  Returns (B, Cout, Lout//2) in f32."""
    B, Cin, L = x.shape
    Cout, Cin2, K = w.shape
    assert Cin == Cin2
    Lpad = L + 2 * padding
    Lout = Lpad - K + 1
    assert Lout >= 2, "need at least one pooled output position"
    Lh = Lout // 2                      # MaxPool1d(2) floors
    Lh_e = Lout - Lh                    # ceil(Lout/2): even positions incl. trailing
    Mp = (Lpad + 1) // 2                # polyphase length

    # Compact polyphase split of the padded input (same total bytes as x_pad,
    # no K-times im2col blow-up; fuses with pad + bf16 cast in XLA).
    x_pad = jnp.pad(x, ((0, 0), (0, 0), (padding, padding)))
    xe = x_pad[..., 0::2]
    xo = x_pad[..., 1::2]
    if xo.shape[-1] < Mp:
        xo = jnp.pad(xo, ((0, 0), (0, 0), (0, Mp - xo.shape[-1])))
    xph = jnp.stack([xe, xo], axis=0).astype(mxu_dtype)        # (2, B, Cin, Mp)

    wt = jnp.transpose(w, (2, 0, 1)).astype(mxu_dtype)         # (K, Cout, Cin)
    g2 = gamma.reshape(Cout, 1).astype(jnp.float32)
    b2 = beta.reshape(Cout, 1).astype(jnp.float32)
    del bias  # cancelled exactly by train-mode BN mean subtraction

    # Channel tile: BN stats are per-channel, so Cout tiles are independent.
    CT = Cout
    for cand in (256, 128, 64, 32, 16, 8):
        if Cout % cand == 0:
            CT = cand
            break

    # Size the scoped-VMEM ask to the tiles (generous 2x headroom, clamped so it
    # is valid on v5e/v6e/v7x).  Re-derive per target for realistic shapes.
    est = (2 * xph.size * 2 + 2 * wt.size * 2 + 4 * Cout * 4
           + 2 * B * Cout * Lh * 4 + 6 * B * CT * Lout * 4)
    vmem_limit = int(min(max(2 * est, 8 * 2 ** 20), 32 * 2 ** 20))

    kernel = partial(conv_block_kernel, n_taps=K, pool_len=Lh, even_len=Lh_e,
                     n_stat=B * Lout, eps=eps)

    return pl.pallas_call(
        kernel,
        out_shape=jax.ShapeDtypeStruct((B, Cout, Lh), jnp.float32),
        grid=(Cout // CT,),
        in_specs=[
            pl.BlockSpec((2, B, Cin, Mp), lambda i: (0, 0, 0, 0)),  # shared polyphase x
            pl.BlockSpec((K, CT, Cin), lambda i: (0, i, 0)),        # weight tile
            pl.BlockSpec((CT, 1), lambda i: (i, 0)),                # gamma
            pl.BlockSpec((CT, 1), lambda i: (i, 0)),                # beta
        ],
        out_specs=pl.BlockSpec((B, CT, Lh), lambda i: (0, i, 0)),
        compiler_params=pltpu.CompilerParams(
            dimension_semantics=("parallel",),
            vmem_limit_bytes=vmem_limit),
    )(xph, wt, g2, b2)


def reference(x, w, bias, gamma, beta, *, padding: int, eps: float = 1e-5,
              mxu_dtype=jnp.bfloat16):
    """Pure-JAX reference: Conv1d(+bias) -> BatchNorm1d(train) -> ELU -> MaxPool1d(2).

    Conv inputs are rounded to the same MXU dtype as the kernel (bf16 in, f32 accum)
    so the comparison isolates kernel logic rather than mixed-precision policy.
    """
    out = lax.conv_general_dilated(
        x.astype(mxu_dtype), w.astype(mxu_dtype), window_strides=(1,),
        padding=[(padding, padding)], dimension_numbers=("NCH", "OIH", "NCH"),
        preferred_element_type=jnp.float32)
    out = out + bias[None, :, None].astype(jnp.float32)
    mean = out.mean(axis=(0, 2), keepdims=True)
    var = ((out - mean) ** 2).mean(axis=(0, 2), keepdims=True)   # biased, like torch
    out = (out - mean) * lax.rsqrt(var + eps) * gamma[None, :, None] + beta[None, :, None]
    out = jnp.where(out > 0, out, jnp.exp(out) - 1.0)
    Lh = out.shape[-1] // 2
    return out[..., :2 * Lh].reshape(out.shape[0], out.shape[1], Lh, 2).max(-1)


if __name__ == "__main__":
    B, C_IN, C_OUT, L, K, PAD = 2, 4, 8, 16, 3, 1

    key = jax.random.PRNGKey(0)
    kx, kw, kb, kg, kbeta = jax.random.split(key, 5)

    x = jax.random.normal(kx, (B, C_IN, L), dtype=jnp.float32)
    bound = 1.0 / np.sqrt(C_IN * K)
    w = jax.random.uniform(kw, (C_OUT, C_IN, K), minval=-bound, maxval=bound,
                           dtype=jnp.float32)
    bias = jax.random.uniform(kb, (C_OUT,), minval=-bound, maxval=bound,
                              dtype=jnp.float32)
    gamma = 1.0 + 0.1 * jax.random.normal(kg, (C_OUT,), dtype=jnp.float32)
    beta = 0.1 * jax.random.normal(kbeta, (C_OUT,), dtype=jnp.float32)

    fn = jax.jit(lambda *a: conv_block_1d(*a, padding=PAD))
    out = jax.block_until_ready(fn(x, w, bias, gamma, beta))
    ref = jax.block_until_ready(reference(x, w, bias, gamma, beta, padding=PAD))
    assert out.shape == (B, C_OUT, (L + 2 * PAD - K + 1) // 2)
    np.testing.assert_allclose(np.asarray(out), np.asarray(ref), atol=1e-4, rtol=1e-4)

    # Extra check: odd conv-output length (exercises the trailing position that is
    # included in the BN batch stats but dropped by the floor-mode max pool).
    x2 = jax.random.normal(kx, (B, C_IN, L + 1), dtype=jnp.float32)
    out2 = jax.block_until_ready(conv_block_1d(x2, w, bias, gamma, beta, padding=PAD))
    ref2 = jax.block_until_ready(reference(x2, w, bias, gamma, beta, padding=PAD))
    np.testing.assert_allclose(np.asarray(out2), np.asarray(ref2), atol=1e-4, rtol=1e-4)

    print("KERNEL_OK")
</pallas_src>

<mosaic_0001>
module attributes {stable_mosaic.version = 11 : i64} {
  func.func @conv_block_kernel(%arg0: i32, %arg1: memref<2x2x4x9xbf16, #tpu.memory_space<vmem>>, %arg2: memref<3x8x4xbf16, #tpu.memory_space<vmem>>, %arg3: memref<8x1xf32, #tpu.memory_space<vmem>>, %arg4: memref<8x1xf32, #tpu.memory_space<vmem>>, %arg5: memref<2x8x8xf32, #tpu.memory_space<vmem>>) attributes {dimension_semantics = [#tpu.dimension_semantics<parallel>], iteration_bounds = array<i64: 1>, scalar_prefetch = 0 : i64, scratch_operands = 0 : i64, tpu.core_type = #tpu.core_type<tc>, window_params = [{pipeline_mode = #tpu.pipeline_mode<synchronous>, transform_indices = @transform_0, window_bounds = array<i64: 2, 2, 4, 9>}, {transform_indices = @transform_1, window_bounds = array<i64: 3, 8, 4>}, {transform_indices = @transform_2, window_bounds = array<i64: 8, 1>}, {transform_indices = @transform_3, window_bounds = array<i64: 8, 1>}, {transform_indices = @transform_4, window_bounds = array<i64: 2, 8, 8>}]} {
    %c0 = arith.constant 0 : index
    %c0_0 = arith.constant 0 : index
    %c0_1 = arith.constant 0 : index
    %c0_2 = arith.constant 0 : index
    %0 = vector.load %arg1[%c0, %c0_0, %c0_1, %c0_2] : memref<2x2x4x9xbf16, #tpu.memory_space<vmem>>, vector<2x2x4x9xbf16>
    %c0_3 = arith.constant 0 : index
    %c0_4 = arith.constant 0 : index
    %c0_5 = arith.constant 0 : index
    %1 = vector.load %arg2[%c0_3, %c0_4, %c0_5] : memref<3x8x4xbf16, #tpu.memory_space<vmem>>, vector<3x8x4xbf16>
    %2 = vector.shape_cast %1 : vector<3x8x4xbf16> to vector<3x1x8x4xbf16>
    %3 = vector.shape_cast %2 : vector<3x1x8x4xbf16> to vector<3x1x8x4xbf16>
    %4 = vector.broadcast %3 : vector<3x1x8x4xbf16> to vector<3x2x8x4xbf16>
    %cst = arith.constant 0.000000e+00 : f32
    %5 = vector.broadcast %cst : f32 to vector<2x8x8xf32>
    %cst_6 = arith.constant 0.000000e+00 : f32
    %6 = vector.broadcast %cst_6 : f32 to vector<2x8x8xf32>
    %7 = vector.extract_strided_slice %4 {offsets = [0, 0, 0, 0], sizes = [1, 2, 8, 4], strides = [1, 1, 1, 1]} : vector<3x2x8x4xbf16> to vector<1x2x8x4xbf16>
    %8 = vector.shape_cast %7 : vector<1x2x8x4xbf16> to vector<2x8x4xbf16>
    %9 = vector.extract_strided_slice %0 {offsets = [0, 0, 0, 0], sizes = [1, 2, 4, 8], strides = [1, 1, 1, 1]} : vector<2x2x4x9xbf16> to vector<1x2x4x8xbf16>
    %10 = vector.shape_cast %9 : vector<1x2x4x8xbf16> to vector<2x4x8xbf16>
    %11 = vector.extract_strided_slice %0 {offsets = [1, 0, 0, 0], sizes = [1, 2, 4, 8], strides = [1, 1, 1, 1]} : vector<2x2x4x9xbf16> to vector<1x2x4x8xbf16>
    %12 = vector.shape_cast %11 : vector<1x2x4x8xbf16> to vector<2x4x8xbf16>
    %cst_7 = arith.constant dense<0.000000e+00> : vector<2x8x8xf32>
    %13 = tpu.matmul %8, %10, %cst_7 {dimension_numbers = #tpu.dot_dimension_numbers<[2], [1], [1], [2], [0, 0, 0, 1, 1, 2], [0], [0]>} : vector<2x8x4xbf16>, vector<2x4x8xbf16>, vector<2x8x8xf32> -> vector<2x8x8xf32>
    %14 = arith.addf %5, %13 : vector<2x8x8xf32>
    %cst_8 = arith.constant dense<0.000000e+00> : vector<2x8x8xf32>
    %15 = tpu.matmul %8, %12, %cst_8 {dimension_numbers = #tpu.dot_dimension_numbers<[2], [1], [1], [2], [0, 0, 0, 1, 1, 2], [0], [0]>} : vector<2x8x4xbf16>, vector<2x4x8xbf16>, vector<2x8x8xf32> -> vector<2x8x8xf32>
    %16 = arith.addf %6, %15 : vector<2x8x8xf32>
    %17 = vector.extract_strided_slice %4 {offsets = [1, 0, 0, 0], sizes = [1, 2, 8, 4], strides = [1, 1, 1, 1]} : vector<3x2x8x4xbf16> to vector<1x2x8x4xbf16>
    %18 = vector.shape_cast %17 : vector<1x2x8x4xbf16> to vector<2x8x4xbf16>
    %19 = vector.extract_strided_slice %0 {offsets = [1, 0, 0, 0], sizes = [1, 2, 4, 8], strides = [1, 1, 1, 1]} : vector<2x2x4x9xbf16> to vector<1x2x4x8xbf16>
    %20 = vector.shape_cast %19 : vector<1x2x4x8xbf16> to vector<2x4x8xbf16>
    %21 = vector.extract_strided_slice %0 {offsets = [0, 0, 0, 1], sizes = [1, 2, 4, 8], strides = [1, 1, 1, 1]} : vector<2x2x4x9xbf16> to vector<1x2x4x8xbf16>
    %22 = vector.shape_cast %21 : vector<1x2x4x8xbf16> to vector<2x4x8xbf16>
    %cst_9 = arith.constant dense<0.000000e+00> : vector<2x8x8xf32>
    %23 = tpu.matmul %18, %20, %cst_9 {dimension_numbers = #tpu.dot_dimension_numbers<[2], [1], [1], [2], [0, 0, 0, 1, 1, 2], [0], [0]>} : vector<2x8x4xbf16>, vector<2x4x8xbf16>, vector<2x8x8xf32> -> vector<2x8x8xf32>
    %24 = arith.addf %14, %23 : vector<2x8x8xf32>
    %cst_10 = arith.constant dense<0.000000e+00> : vector<2x8x8xf32>
    %25 = tpu.matmul %18, %22, %cst_10 {dimension_numbers = #tpu.dot_dimension_numbers<[2], [1], [1], [2], [0, 0, 0, 1, 1, 2], [0], [0]>} : vector<2x8x4xbf16>, vector<2x4x8xbf16>, vector<2x8x8xf32> -> vector<2x8x8xf32>
    %26 = arith.addf %16, %25 : vector<2x8x8xf32>
    %27 = vector.extract_strided_slice %4 {offsets = [2, 0, 0, 0], sizes = [1, 2, 8, 4], strides = [1, 1, 1, 1]} : vector<3x2x8x4xbf16> to vector<1x2x8x4xbf16>
    %28 = vector.shape_cast %27 : vector<1x2x8x4xbf16> to vector<2x8x4xbf16>
    %29 = vector.extract_strided_slice %0 {offsets = [0, 0, 0, 1], sizes = [1, 2, 4, 8], strides = [1, 1, 1, 1]} : vector<2x2x4x9xbf16> to vector<1x2x4x8xbf16>
    %30 = vector.shape_cast %29 : vector<1x2x4x8xbf16> to vector<2x4x8xbf16>
    %31 = vector.extract_strided_slice %0 {offsets = [1, 0, 0, 1], sizes = [1, 2, 4, 8], strides = [1, 1, 1, 1]} : vector<2x2x4x9xbf16> to vector<1x2x4x8xbf16>
    %32 = vector.shape_cast %31 : vector<1x2x4x8xbf16> to vector<2x4x8xbf16>
    %cst_11 = arith.constant dense<0.000000e+00> : vector<2x8x8xf32>
    %33 = tpu.matmul %28, %30, %cst_11 {dimension_numbers = #tpu.dot_dimension_numbers<[2], [1], [1], [2], [0, 0, 0, 1, 1, 2], [0], [0]>} : vector<2x8x4xbf16>, vector<2x4x8xbf16>, vector<2x8x8xf32> -> vector<2x8x8xf32>
    %34 = arith.addf %24, %33 : vector<2x8x8xf32>
    %cst_12 = arith.constant dense<0.000000e+00> : vector<2x8x8xf32>
    %35 = tpu.matmul %28, %32, %cst_12 {dimension_numbers = #tpu.dot_dimension_numbers<[2], [1], [1], [2], [0, 0, 0, 1, 1, 2], [0], [0]>} : vector<2x8x4xbf16>, vector<2x4x8xbf16>, vector<2x8x8xf32> -> vector<2x8x8xf32>
    %36 = arith.addf %26, %35 : vector<2x8x8xf32>
    %cst_13 = arith.constant dense<0.000000e+00> : vector<2x8xf32>
    %37 = vector.multi_reduction <add>, %34, %cst_13 [2] : vector<2x8x8xf32> to vector<2x8xf32>
    %38 = vector.shape_cast %37 : vector<2x8xf32> to vector<2x8x1xf32>
    %cst_14 = arith.constant dense<0.000000e+00> : vector<8x1xf32>
    %39 = vector.multi_reduction <add>, %38, %cst_14 [0] : vector<2x8x1xf32> to vector<8x1xf32>
    %40 = vector.shape_cast %39 : vector<8x1xf32> to vector<1x8x1xf32>
    %cst_15 = arith.constant dense<0.000000e+00> : vector<2x8xf32>
    %41 = vector.multi_reduction <add>, %36, %cst_15 [2] : vector<2x8x8xf32> to vector<2x8xf32>
    %42 = vector.shape_cast %41 : vector<2x8xf32> to vector<2x8x1xf32>
    %cst_16 = arith.constant dense<0.000000e+00> : vector<8x1xf32>
    %43 = vector.multi_reduction <add>, %42, %cst_16 [0] : vector<2x8x1xf32> to vector<8x1xf32>
    %44 = vector.shape_cast %43 : vector<8x1xf32> to vector<1x8x1xf32>
    %45 = arith.addf %40, %44 : vector<1x8x1xf32>
    %46 = arith.mulf %34, %34 : vector<2x8x8xf32>
    %cst_17 = arith.constant dense<0.000000e+00> : vector<2x8xf32>
    %47 = vector.multi_reduction <add>, %46, %cst_17 [2] : vector<2x8x8xf32> to vector<2x8xf32>
    %48 = vector.shape_cast %47 : vector<2x8xf32> to vector<2x8x1xf32>
    %cst_18 = arith.constant dense<0.000000e+00> : vector<8x1xf32>
    %49 = vector.multi_reduction <add>, %48, %cst_18 [0] : vector<2x8x1xf32> to vector<8x1xf32>
    %50 = vector.shape_cast %49 : vector<8x1xf32> to vector<1x8x1xf32>
    %51 = arith.mulf %36, %36 : vector<2x8x8xf32>
    %cst_19 = arith.constant dense<0.000000e+00> : vector<2x8xf32>
    %52 = vector.multi_reduction <add>, %51, %cst_19 [2] : vector<2x8x8xf32> to vector<2x8xf32>
    %53 = vector.shape_cast %52 : vector<2x8xf32> to vector<2x8x1xf32>
    %cst_20 = arith.constant dense<0.000000e+00> : vector<8x1xf32>
    %54 = vector.multi_reduction <add>, %53, %cst_20 [0] : vector<2x8x1xf32> to vector<8x1xf32>
    %55 = vector.shape_cast %54 : vector<8x1xf32> to vector<1x8x1xf32>
    %56 = arith.addf %50, %55 : vector<1x8x1xf32>
    %cst_21 = arith.constant 3.125000e-02 : f32
    %57 = vector.broadcast %cst_21 : f32 to vector<1x8x1xf32>
    %58 = arith.mulf %45, %57 : vector<1x8x1xf32>
    %cst_22 = arith.constant 3.125000e-02 : f32
    %59 = vector.broadcast %cst_22 : f32 to vector<1x8x1xf32>
    %60 = arith.mulf %56, %59 : vector<1x8x1xf32>
    %61 = arith.mulf %58, %58 : vector<1x8x1xf32>
    %62 = arith.subf %60, %61 : vector<1x8x1xf32>
    %cst_23 = arith.constant 0.000000e+00 : f32
    %63 = vector.broadcast %cst_23 : f32 to vector<1x8x1xf32>
    %64 = arith.maximumf %62, %63 : vector<1x8x1xf32>
    %c0_24 = arith.constant 0 : index
    %c0_25 = arith.constant 0 : index
    %65 = vector.load %arg3[%c0_24, %c0_25] : memref<8x1xf32, #tpu.memory_space<vmem>>, vector<8x1xf32>
    %66 = vector.shape_cast %65 : vector<8x1xf32> to vector<1x8x1xf32>
    %cst_26 = arith.constant 9.99999974E-6 : f32
    %67 = vector.broadcast %cst_26 : f32 to vector<1x8x1xf32>
    %68 = arith.addf %64, %67 : vector<1x8x1xf32>
    %69 = math.rsqrt %68 : vector<1x8x1xf32>
    %70 = arith.mulf %66, %69 : vector<1x8x1xf32>
    %c0_27 = arith.constant 0 : index
    %c0_28 = arith.constant 0 : index
    %71 = vector.load %arg4[%c0_27, %c0_28] : memref<8x1xf32, #tpu.memory_space<vmem>>, vector<8x1xf32>
    %72 = vector.shape_cast %71 : vector<8x1xf32> to vector<1x8x1xf32>
    %73 = arith.mulf %58, %70 : vector<1x8x1xf32>
    %74 = arith.subf %72, %73 : vector<1x8x1xf32>
    %75 = vector.broadcast %70 : vector<1x8x1xf32> to vector<2x8x8xf32>
    %76 = arith.mulf %34, %75 : vector<2x8x8xf32>
    %77 = vector.broadcast %74 : vector<1x8x1xf32> to vector<2x8x8xf32>
    %78 = arith.addf %76, %77 : vector<2x8x8xf32>
    %79 = vector.broadcast %70 : vector<1x8x1xf32> to vector<2x8x8xf32>
    %80 = arith.mulf %36, %79 : vector<2x8x8xf32>
    %81 = vector.broadcast %74 : vector<1x8x1xf32> to vector<2x8x8xf32>
    %82 = arith.addf %80, %81 : vector<2x8x8xf32>
    %83 = arith.maximumf %78, %82 : vector<2x8x8xf32>
    %cst_29 = arith.constant 0.000000e+00 : f32
    %84 = vector.broadcast %cst_29 : f32 to vector<2x8x8xf32>
    %85 = arith.cmpf ogt, %83, %84 : vector<2x8x8xf32>
    %86 = math.exp %83 : vector<2x8x8xf32>
    %cst_30 = arith.constant 1.000000e+00 : f32
    %87 = vector.broadcast %cst_30 : f32 to vector<2x8x8xf32>
    %88 = arith.subf %86, %87 : vector<2x8x8xf32>
    %89 = arith.select %85, %83, %88 : vector<2x8x8xi1>, vector<2x8x8xf32>
    %c0_31 = arith.constant 0 : index
    %c0_32 = arith.constant 0 : index
    %c0_33 = arith.constant 0 : index
    %90 = vector.load %arg5[%c0_31, %c0_32, %c0_33] : memref<2x8x8xf32, #tpu.memory_space<vmem>>, vector<2x8x8xf32>
    tpu.vector_store %arg5[%c0_31, %c0_32, %c0_33], %89 {strides = array<i32>} : memref<2x8x8xf32, #tpu.memory_space<vmem>>, vector<2x8x8xf32>,
    return
  }
  func.func @transform_0(%arg0: i32) -> (i32, i32, i32, i32) {
    %c0_i32 = arith.constant 0 : i32
    %c0_i32_0 = arith.constant 0 : i32
    %c0_i32_1 = arith.constant 0 : i32
    %c0_i32_2 = arith.constant 0 : i32
    %c0_i32_3 = arith.constant 0 : i32
    return %c0_i32, %c0_i32_0, %c0_i32_1, %c0_i32_2 : i32, i32, i32, i32
  }
  func.func @transform_1(%arg0: i32) -> (i32, i32, i32) {
    %c0_i32 = arith.constant 0 : i32
    %c0_i32_0 = arith.constant 0 : i32
    %c0_i32_1 = arith.constant 0 : i32
    return %c0_i32, %arg0, %c0_i32_0 : i32, i32, i32
  }
  func.func @transform_2(%arg0: i32) -> (i32, i32) {
    %c0_i32 = arith.constant 0 : i32
    %c0_i32_0 = arith.constant 0 : i32
    return %arg0, %c0_i32 : i32, i32
  }
  func.func @transform_3(%arg0: i32) -> (i32, i32) {
    %c0_i32 = arith.constant 0 : i32
    %c0_i32_0 = arith.constant 0 : i32
    return %arg0, %c0_i32 : i32, i32
  }
  func.func @transform_4(%arg0: i32) -> (i32, i32, i32) {
    %c0_i32 = arith.constant 0 : i32
    %c0_i32_0 = arith.constant 0 : i32
    %c0_i32_1 = arith.constant 0 : i32
    return %c0_i32, %arg0, %c0_i32_0 : i32, i32, i32
  }
}

</mosaic_0001>

<llo_original>
// kernel: _lambda_.1
$region0: #{_lambda_.1}
  #allocation0 [shape = 'u32[]', space=smem, size = 0x4, offset = 0x4, fixed_abs, tag = 'smem constant byte address 0x4 - core index']
  #allocation1 [shape = 'u32[144,128]{1,0:T(1,128)}', space=vmem, size = 0x12000, scoped, tag = 'internal scratch']
  %s0 = inlined_call_operand.vmem [shape: bf16[2,2,4,9], index: 0, kind: input, shape index: {}]
  %s1 = inlined_call_operand.vmem [shape: bf16[3,8,4], index: 1, kind: input, shape index: {}]
  %s2 = inlined_call_operand.vmem [shape: f32[8,1], index: 2, kind: input, shape index: {}]
  %s3 = inlined_call_operand.vmem [shape: f32[8,1], index: 3, kind: input, shape index: {}]
  %s4 = inlined_call_operand.hbm [shape: f32[2,8,8], index: 4, kind: output, shape index: {}]
  %s5 = sld [smem:[#allocation0]]
  $region26: #{_lambda_.1} parent=0
    _
  %s7 = ssub.s32 1, %s5
  %s8 = scalar_select 0, %s7, %s5
  $region1: #{_lambda_.1} parent=0
    #allocation2 [shape = 'u8[8192]{0}', space=vmem, size = 0x2000, scoped, tag = 'output window, operand 0, single buffered']
    #allocation3 [shape = 's32[1]{0}', space=sflag, size = 0x4, scoped, tag = 'scoped memory for _lambda_.1']
    %9 = vsyncpa [#allocation3], 0
    // Predicated region
    $region2: #{_lambda_.1} parent=1 // pred_check
      _
    $region3: #{_lambda_.1} parent=1 // pred_check_branch
      %11 = sbr.rel (0) target = $region5
    $region4: #{_lambda_.1} parent=1 // pred_region
      _
    $region5: #{_lambda_.1} parent=1 // pred_fallthru
      _
    // Predicated region
    $region6: #{_lambda_.1} parent=1 // pred_check
      _
    $region7: #{_lambda_.1} parent=1 // pred_check_branch
      %13 = sbr.rel (0) target = $region9
    $region8: #{_lambda_.1} parent=1 // pred_region
      _
    $region9: #{_lambda_.1} parent=1 // pred_fallthru
      _
    // Predicated region
    $region10: #{_lambda_.1} parent=1 // pred_check
      _
    $region11: #{_lambda_.1} parent=1 // pred_check_branch
      %15 = sbr.rel (0) target = $region13
    $region12: #{_lambda_.1} parent=1 // pred_region
      _
    $region13: #{_lambda_.1} parent=1 // pred_fallthru
      _
    // Predicated region
    $region14: #{_lambda_.1} parent=1 // pred_check
      _
    $region15: #{_lambda_.1} parent=1 // pred_check_branch
      %17 = sbr.rel (0) target = $region17
    $region16: #{_lambda_.1} parent=1 // pred_region
      _
    $region17: #{_lambda_.1} parent=1 // pred_fallthru
      _
    %v19 = vld [vmem:[%s0] sm:$0x3]
    %v20 = vld [vmem:[%s0 + $0x2] sm:$0x3]
    %v21 = vld [vmem:[%s0 + $0x4] sm:$0x3]
    %v22 = vld [vmem:[%s0 + $0x6] sm:$0x3]
    %v23 = vld [vmem:[%s1] sm:$0xf]
    %v24 = vld [vmem:[%s1 + $0x4] sm:$0xf]
    %v25 = vld [vmem:[%s1 + $0x8] sm:$0xf]
    %vm26 = vcmask 31744
    %v28 = vsel %vm26, %v24, 0
    %vm30 = vcmask 1041408
    %v32 = vsel %vm30, %v21, 0
    %34 = vmatprep.subr.bf16.mxu0 0
    %35 = vmatpush1.bf16.msra.mxu0 %v32
    %36 = vmatprep.subr.bf16.mxu0 0
    %37 = vmatpush1.bf16.msra.mxu0 0
    %38 = vmatprep.subr.bf16.mxu0 0
    %39 = vmatpush1.bf16.msra.mxu0 0
    %40 = vmatprep.subr.bf16.mxu0 0
    %41 = vmatpush1.bf16.msra.mxu0 0
    %42 = vmatprep.subr.bf16.mxu0 0
    %43 = vmatpush1.bf16.msra.mxu0 0
    %44 = vmatprep.subr.bf16.mxu0 0
    %45 = vmatpush1.bf16.msra.mxu0 0
    %46 = vmatprep.subr.bf16.mxu0 0
    %47 = vmatpush1.bf16.msra.mxu0 0
    %48 = vmatprep.subr.bf16.mxu0 0
    %49 = vmatpush1.bf16.msra.mxu0 0
    %50 = vmatprep.subr.bf16.mxu0 0
    %51 = vmatpush1.bf16.msra.mxu0 0
    %52 = vmatprep.subr.bf16.mxu0 0
    %53 = vmatpush1.bf16.msra.mxu0 0
    %54 = vmatprep.subr.bf16.mxu0 0
    %55 = vmatpush1.bf16.msra.mxu0 0
    %56 = vmatprep.subr.bf16.mxu0 0
    %57 = vmatpush1.bf16.msra.mxu0 0
    %58 = vmatprep.subr.bf16.mxu0 0
    %59 = vmatpush1.bf16.msra.mxu0 0
    %60 = vmatprep.subr.bf16.mxu0 0
    %61 = vmatpush1.bf16.msra.mxu0 0
    %62 = vmatprep.subr.bf16.mxu0 0
    %63 = vmatpush1.bf16.msra.mxu0 0
    %64 = vmatprep.subr.bf16.mxu0 0
    %65 = vmatpush1.bf16.msra.mxu0 0
    %66 = vmatprep.mubr.bf16.mxu0 0
    %67 = vmatmul.mubr.bf16.gmra.mrb[0].mxu0 %v28
    %v68 = vpop.f32.mrb[0].mxu0
    %v69 = vadd.f32 0.0, %v68
    %v70 = vpop.f32.mrb[0].mxu0
    %v71 = vpop.f32.mrb[0].mxu0
    %v72 = vpop.f32.mrb[0].mxu0
    %73 = vdwg.mxu0
    %v75 = vsel %vm30, %v22, 0
    %77 = vmatprep.subr.bf16.mxu0 0
    %78 = vmatpush1.bf16.msra.mxu0 %v75
    %79 = vmatprep.subr.bf16.mxu0 0
    %80 = vmatpush1.bf16.msra.mxu0 0
    %81 = vmatprep.subr.bf16.mxu0 0
    %82 = vmatpush1.bf16.msra.mxu0 0
    %83 = vmatprep.subr.bf16.mxu0 0
    %84 = vmatpush1.bf16.msra.mxu0 0
    %85 = vmatprep.subr.bf16.mxu0 0
    %86 = vmatpush1.bf16.msra.mxu0 0
    %87 = vmatprep.subr.bf16.mxu0 0
    %88 = vmatpush1.bf16.msra.mxu0 0
    %89 = vmatprep.subr.bf16.mxu0 0
    %90 = vmatpush1.bf16.msra.mxu0 0
    %91 = vmatprep.subr.bf16.mxu0 0
    %92 = vmatpush1.bf16.msra.mxu0 0
    %93 = vmatprep.subr.bf16.mxu0 0
    %94 = vmatpush1.bf16.msra.mxu0 0
    %95 = vmatprep.subr.bf16.mxu0 0
    %96 = vmatpush1.bf16.msra.mxu0 0
    %97 = vmatprep.subr.bf16.mxu0 0
    %98 = vmatpush1.bf16.msra.mxu0 0
    %99 = vmatprep.subr.bf16.mxu0 0
    %100 = vmatpush1.bf16.msra.mxu0 0
    %101 = vmatprep.subr.bf16.mxu0 0
    %102 = vmatpush1.bf16.msra.mxu0 0
    %103 = vmatprep.subr.bf16.mxu0 0
    %104 = vmatpush1.bf16.msra.mxu0 0
    %105 = vmatprep.subr.bf16.mxu0 0
    %106 = vmatpush1.bf16.msra.mxu0 0
    %107 = vmatprep.subr.bf16.mxu0 0
    %108 = vmatpush1.bf16.msra.mxu0 0
    %109 = vmatprep.mubr.bf16.mxu0 0
    %110 = vmatmul.mubr.bf16.gmra.mrb[0].mxu0 %v28
    %v111 = vpop.f32.mrb[0].mxu0
    %v112 = vadd.f32 0.0, %v111
    %v113 = vpop.f32.mrb[0].mxu0
    %v114 = vpop.f32.mrb[0].mxu0
    %v115 = vpop.f32.mrb[0].mxu0
    %116 = vdwg.mxu0
    %v118 = vsel %vm26, %v23, 0
    %v121 = vsel %vm30, %v19, 0
    %123 = vmatprep.subr.bf16.mxu0 0
    %124 = vmatpush1.bf16.msra.mxu0 %v121
    %125 = vmatprep.subr.bf16.mxu0 0
    %126 = vmatpush1.bf16.msra.mxu0 0
    %127 = vmatprep.subr.bf16.mxu0 0
    %128 = vmatpush1.bf16.msra.mxu0 0
    %129 = vmatprep.subr.bf16.mxu0 0
    %130 = vmatpush1.bf16.msra.mxu0 0
    %131 = vmatprep.subr.bf16.mxu0 0
    %132 = vmatpush1.bf16.msra.mxu0 0
    %133 = vmatprep.subr.bf16.mxu0 0
    %134 = vmatpush1.bf16.msra.mxu0 0
    %135 = vmatprep.subr.bf16.mxu0 0
    %136 = vmatpush1.bf16.msra.mxu0 0
    %137 = vmatprep.subr.bf16.mxu0 0
    %138 = vmatpush1.bf16.msra.mxu0 0
    %139 = vmatprep.subr.bf16.mxu0 0
    %140 = vmatpush1.bf16.msra.mxu0 0
    %141 = vmatprep.subr.bf16.mxu0 0
    %142 = vmatpush1.bf16.msra.mxu0 0
    %143 = vmatprep.subr.bf16.mxu0 0
    %144 = vmatpush1.bf16.msra.mxu0 0
    %145 = vmatprep.subr.bf16.mxu0 0
    %146 = vmatpush1.bf16.msra.mxu0 0
    %147 = vmatprep.subr.bf16.mxu0 0
    %148 = vmatpush1.bf16.msra.mxu0 0
    %149 = vmatprep.subr.bf16.mxu0 0
    %150 = vmatpush1.bf16.msra.mxu0 0
    %151 = vmatprep.subr.bf16.mxu0 0
    %152 = vmatpush1.bf16.msra.mxu0 0
    %153 = vmatprep.subr.bf16.mxu0 0
    %154 = vmatpush1.bf16.msra.mxu0 0
    %155 = vmatprep.mubr.bf16.mxu0 0
    %156 = vmatmul.mubr.bf16.gmra.mrb[0].mxu0 %v118
    %v157 = vpop.f32.mrb[0].mxu0
    %v158 = vadd.f32 %v69, %v157
    %v159 = vpop.f32.mrb[0].mxu0
    %v160 = vpop.f32.mrb[0].mxu0
    %v161 = vpop.f32.mrb[0].mxu0
    %162 = vdwg.mxu0
    %v164 = vsel %vm30, %v20, 0
    %166 = vmatprep.subr.bf16.mxu0 0
    %167 = vmatpush1.bf16.msra.mxu0 %v164
    %168 = vmatprep.subr.bf16.mxu0 0
    %169 = vmatpush1.bf16.msra.mxu0 0
    %170 = vmatprep.subr.bf16.mxu0 0
    %171 = vmatpush1.bf16.msra.mxu0 0
    %172 = vmatprep.subr.bf16.mxu0 0
    %173 = vmatpush1.bf16.msra.mxu0 0
    %174 = vmatprep.subr.bf16.mxu0 0
    %175 = vmatpush1.bf16.msra.mxu0 0
    %176 = vmatprep.subr.bf16.mxu0 0
    %177 = vmatpush1.bf16.msra.mxu0 0
    %178 = vmatprep.subr.bf16.mxu0 0
    %179 = vmatpush1.bf16.msra.mxu0 0
    %180 = vmatprep.subr.bf16.mxu0 0
    %181 = vmatpush1.bf16.msra.mxu0 0
    %182 = vmatprep.subr.bf16.mxu0 0
    %183 = vmatpush1.bf16.msra.mxu0 0
    %184 = vmatprep.subr.bf16.mxu0 0
    %185 = vmatpush1.bf16.msra.mxu0 0
    %186 = vmatprep.subr.bf16.mxu0 0
    %187 = vmatpush1.bf16.msra.mxu0 0
    %188 = vmatprep.subr.bf16.mxu0 0
    %189 = vmatpush1.bf16.msra.mxu0 0
    %190 = vmatprep.subr.bf16.mxu0 0
    %191 = vmatpush1.bf16.msra.mxu0 0
    %192 = vmatprep.subr.bf16.mxu0 0
    %193 = vmatpush1.bf16.msra.mxu0 0
    %194 = vmatprep.subr.bf16.mxu0 0
    %195 = vmatpush1.bf16.msra.mxu0 0
    %196 = vmatprep.subr.bf16.mxu0 0
    %197 = vmatpush1.bf16.msra.mxu0 0
    %198 = vmatprep.mubr.bf16.mxu0 0
    %199 = vmatmul.mubr.bf16.gmra.mrb[0].mxu0 %v118
    %v200 = vpop.f32.mrb[0].mxu0
    %v201 = vadd.f32 %v112, %v200
    %v202 = vpop.f32.mrb[0].mxu0
    %v203 = vpop.f32.mrb[0].mxu0
    %v204 = vpop.f32.mrb[0].mxu0
    %205 = vdwg.mxu0
    %v208 = vunpack.c.l.s4 1983009808
    %v209 = vunpack.c.0.s8 %v208
    %v210 = vlaneseq
    %v211 = vshrl.u32 %v210, 7
    %v212 = vsub.s32 %v209, %v211
    %v213 = vrot.slane %v19, %v212
    %214 = vrot.lane.b32.xlu0 %v213, 127
    %v215 = vpop.permute.xlu0 %214
    %v217 = vsel %vm30, %v215, 0
    %219 = vmatprep.subr.bf16.mxu0 0
    %220 = vmatpush1.bf16.msra.mxu0 %v217
    %221 = vmatprep.subr.bf16.mxu0 0
    %222 = vmatpush1.bf16.msra.mxu0 0
    %223 = vmatprep.subr.bf16.mxu0 0
    %224 = vmatpush1.bf16.msra.mxu0 0
    %225 = vmatprep.subr.bf16.mxu0 0
    %226 = vmatpush1.bf16.msra.mxu0 0
    %227 = vmatprep.subr.bf16.mxu0 0
    %228 = vmatpush1.bf16.msra.mxu0 0
    %229 = vmatprep.subr.bf16.mxu0 0
    %230 = vmatpush1.bf16.msra.mxu0 0
    %231 = vmatprep.subr.bf16.mxu0 0
    %232 = vmatpush1.bf16.msra.mxu0 0
    %233 = vmatprep.subr.bf16.mxu0 0
    %234 = vmatpush1.bf16.msra.mxu0 0
    %235 = vmatprep.subr.bf16.mxu0 0
    %236 = vmatpush1.bf16.msra.mxu0 0
    %237 = vmatprep.subr.bf16.mxu0 0
    %238 = vmatpush1.bf16.msra.mxu0 0
    %239 = vmatprep.subr.bf16.mxu0 0
    %240 = vmatpush1.bf16.msra.mxu0 0
    %241 = vmatprep.subr.bf16.mxu0 0
    %242 = vmatpush1.bf16.msra.mxu0 0
    %243 = vmatprep.subr.bf16.mxu0 0
    %244 = vmatpush1.bf16.msra.mxu0 0
    %245 = vmatprep.subr.bf16.mxu0 0
    %246 = vmatpush1.bf16.msra.mxu0 0
    %247 = vmatprep.subr.bf16.mxu0 0
    %248 = vmatpush1.bf16.msra.mxu0 0
    %249 = vmatprep.subr.bf16.mxu0 0
    %250 = vmatpush1.bf16.msra.mxu0 0
    %251 = vmatprep.mubr.bf16.mxu0 0
    %252 = vmatmul.mubr.bf16.gmra.mrb[0].mxu0 %v28
    %v253 = vpop.f32.mrb[0].mxu0
    %v254 = vadd.f32 0.0, %v253
    %v255 = vpop.f32.mrb[0].mxu0
    %v256 = vpop.f32.mrb[0].mxu0
    %v257 = vpop.f32.mrb[0].mxu0
    %258 = vdwg.mxu0
    %v261 = vunpack.c.l.s4 1983009808
    %v262 = vunpack.c.0.s8 %v261
    %v263 = vlaneseq
    %v264 = vshrl.u32 %v263, 7
    %v265 = vsub.s32 %v262, %v264
    %v266 = vrot.slane %v20, %v265
    %267 = vrot.lane.b32.xlu0 %v266, 127
    %v268 = vpop.permute.xlu0 %267
    %v270 = vsel %vm30, %v268, 0
    %272 = vmatprep.subr.bf16.mxu0 0
    %273 = vmatpush1.bf16.msra.mxu0 %v270
    %274 = vmatprep.subr.bf16.mxu0 0
    %275 = vmatpush1.bf16.msra.mxu0 0
    %276 = vmatprep.subr.bf16.mxu0 0
    %277 = vmatpush1.bf16.msra.mxu0 0
    %278 = vmatprep.subr.bf16.mxu0 0
    %279 = vmatpush1.bf16.msra.mxu0 0
    %280 = vmatprep.subr.bf16.mxu0 0
    %281 = vmatpush1.bf16.msra.mxu0 0
    %282 = vmatprep.subr.bf16.mxu0 0
    %283 = vmatpush1.bf16.msra.mxu0 0
    %284 = vmatprep.subr.bf16.mxu0 0
    %285 = vmatpush1.bf16.msra.mxu0 0
    %286 = vmatprep.subr.bf16.mxu0 0
    %287 = vmatpush1.bf16.msra.mxu0 0
    %288 = vmatprep.subr.bf16.mxu0 0
    %289 = vmatpush1.bf16.msra.mxu0 0
    %290 = vmatprep.subr.bf16.mxu0 0
    %291 = vmatpush1.bf16.msra.mxu0 0
    %292 = vmatprep.subr.bf16.mxu0 0
    %293 = vmatpush1.bf16.msra.mxu0 0
    %294 = vmatprep.subr.bf16.mxu0 0
    %295 = vmatpush1.bf16.msra.mxu0 0
    %296 = vmatprep.subr.bf16.mxu0 0
    %297 = vmatpush1.bf16.msra.mxu0 0
    %298 = vmatprep.subr.bf16.mxu0 0
    %299 = vmatpush1.bf16.msra.mxu0 0
    %300 = vmatprep.subr.bf16.mxu0 0
    %301 = vmatpush1.bf16.msra.mxu0 0
    %302 = vmatprep.subr.bf16.mxu0 0
    %303 = vmatpush1.bf16.msra.mxu0 0
    %304 = vmatprep.mubr.bf16.mxu0 0
    %305 = vmatmul.mubr.bf16.gmra.mrb[0].mxu0 %v28
    %v306 = vpop.f32.mrb[0].mxu0
    %v307 = vadd.f32 0.0, %v306
    %v308 = vpop.f32.mrb[0].mxu0
    %v309 = vpop.f32.mrb[0].mxu0
    %v310 = vpop.f32.mrb[0].mxu0
    %311 = vdwg.mxu0
    %312 = vmatprep.subr.bf16.mxu0 0
    %313 = vmatpush1.bf16.msra.mxu0 %v32
    %314 = vmatprep.subr.bf16.mxu0 0
    %315 = vmatpush1.bf16.msra.mxu0 0
    %316 = vmatprep.subr.bf16.mxu0 0
    %317 = vmatpush1.bf16.msra.mxu0 0
    %318 = vmatprep.subr.bf16.mxu0 0
    %319 = vmatpush1.bf16.msra.mxu0 0
    %320 = vmatprep.subr.bf16.mxu0 0
    %321 = vmatpush1.bf16.msra.mxu0 0
    %322 = vmatprep.subr.bf16.mxu0 0
    %323 = vmatpush1.bf16.msra.mxu0 0
    %324 = vmatprep.subr.bf16.mxu0 0
    %325 = vmatpush1.bf16.msra.mxu0 0
    %326 = vmatprep.subr.bf16.mxu0 0
    %327 = vmatpush1.bf16.msra.mxu0 0
    %328 = vmatprep.subr.bf16.mxu0 0
    %329 = vmatpush1.bf16.msra.mxu0 0
    %330 = vmatprep.subr.bf16.mxu0 0
    %331 = vmatpush1.bf16.msra.mxu0 0
    %332 = vmatprep.subr.bf16.mxu0 0
    %333 = vmatpush1.bf16.msra.mxu0 0
    %334 = vmatprep.subr.bf16.mxu0 0
    %335 = vmatpush1.bf16.msra.mxu0 0
    %336 = vmatprep.subr.bf16.mxu0 0
    %337 = vmatpush1.bf16.msra.mxu0 0
    %338 = vmatprep.subr.bf16.mxu0 0
    %339 = vmatpush1.bf16.msra.mxu0 0
    %340 = vmatprep.subr.bf16.mxu0 0
    %341 = vmatpush1.bf16.msra.mxu0 0
    %342 = vmatprep.subr.bf16.mxu0 0
    %343 = vmatpush1.bf16.msra.mxu0 0
    %344 = vmatprep.mubr.bf16.mxu0 0
    %345 = vmatmul.mubr.bf16.gmra.mrb[0].mxu0 %v118
    %v346 = vpop.f32.mrb[0].mxu0
    %v347 = vadd.f32 %v254, %v346
    %v348 = vpop.f32.mrb[0].mxu0
    %v349 = vpop.f32.mrb[0].mxu0
    %v350 = vpop.f32.mrb[0].mxu0
    %351 = vdwg.mxu0
    %352 = vmatprep.subr.bf16.mxu0 0
    %353 = vmatpush1.bf16.msra.mxu0 %v75
    %354 = vmatprep.subr.bf16.mxu0 0
    %355 = vmatpush1.bf16.msra.mxu0 0
    %356 = vmatprep.subr.bf16.mxu0 0
    %357 = vmatpush1.bf16.msra.mxu0 0
    %358 = vmatprep.subr.bf16.mxu0 0
    %359 = vmatpush1.bf16.msra.mxu0 0
    %360 = vmatprep.subr.bf16.mxu0 0
    %361 = vmatpush1.bf16.msra.mxu0 0
    %362 = vmatprep.subr.bf16.mxu0 0
    %363 = vmatpush1.bf16.msra.mxu0 0
    %364 = vmatprep.subr.bf16.mxu0 0
    %365 = vmatpush1.bf16.msra.mxu0 0
    %366 = vmatprep.subr.bf16.mxu0 0
    %367 = vmatpush1.bf16.msra.mxu0 0
    %368 = vmatprep.subr.bf16.mxu0 0
    %369 = vmatpush1.bf16.msra.mxu0 0
    %370 = vmatprep.subr.bf16.mxu0 0
    %371 = vmatpush1.bf16.msra.mxu0 0
    %372 = vmatprep.subr.bf16.mxu0 0
    %373 = vmatpush1.bf16.msra.mxu0 0
    %374 = vmatprep.subr.bf16.mxu0 0
    %375 = vmatpush1.bf16.msra.mxu0 0
    %376 = vmatprep.subr.bf16.mxu0 0
    %377 = vmatpush1.bf16.msra.mxu0 0
    %378 = vmatprep.subr.bf16.mxu0 0
    %379 = vmatpush1.bf16.msra.mxu0 0
    %380 = vmatprep.subr.bf16.mxu0 0
    %381 = vmatpush1.bf16.msra.mxu0 0
    %382 = vmatprep.subr.bf16.mxu0 0
    %383 = vmatpush1.bf16.msra.mxu0 0
    %384 = vmatprep.mubr.bf16.mxu0 0
    %385 = vmatmul.mubr.bf16.gmra.mrb[0].mxu0 %v118
    %v386 = vpop.f32.mrb[0].mxu0
    %v387 = vadd.f32 %v307, %v386
    %v388 = vpop.f32.mrb[0].mxu0
    %v389 = vpop.f32.mrb[0].mxu0
    %v390 = vpop.f32.mrb[0].mxu0
    %391 = vdwg.mxu0
    %v393 = vsel %vm26, %v25, 0
    %395 = vmatprep.subr.bf16.mxu0 0
    %396 = vmatpush1.bf16.msra.mxu0 %v217
    %397 = vmatprep.subr.bf16.mxu0 0
    %398 = vmatpush1.bf16.msra.mxu0 0
    %399 = vmatprep.subr.bf16.mxu0 0
    %400 = vmatpush1.bf16.msra.mxu0 0
    %401 = vmatprep.subr.bf16.mxu0 0
    %402 = vmatpush1.bf16.msra.mxu0 0
    %403 = vmatprep.subr.bf16.mxu0 0
    %404 = vmatpush1.bf16.msra.mxu0 0
    %405 = vmatprep.subr.bf16.mxu0 0
    %406 = vmatpush1.bf16.msra.mxu0 0
    %407 = vmatprep.subr.bf16.mxu0 0
    %408 = vmatpush1.bf16.msra.mxu0 0
    %409 = vmatprep.subr.bf16.mxu0 0
    %410 = vmatpush1.bf16.msra.mxu0 0
    %411 = vmatprep.subr.bf16.mxu0 0
    %412 = vmatpush1.bf16.msra.mxu0 0
    %413 = vmatprep.subr.bf16.mxu0 0
    %414 = vmatpush1.bf16.msra.mxu0 0
    %415 = vmatprep.subr.bf16.mxu0 0
    %416 = vmatpush1.bf16.msra.mxu0 0
    %417 = vmatprep.subr.bf16.mxu0 0
    %418 = vmatpush1.bf16.msra.mxu0 0
    %419 = vmatprep.subr.bf16.mxu0 0
    %420 = vmatpush1.bf16.msra.mxu0 0
    %421 = vmatprep.subr.bf16.mxu0 0
    %422 = vmatpush1.bf16.msra.mxu0 0
    %423 = vmatprep.subr.bf16.mxu0 0
    %424 = vmatpush1.bf16.msra.mxu0 0
    %425 = vmatprep.subr.bf16.mxu0 0
    %426 = vmatpush1.bf16.msra.mxu0 0
    %427 = vmatprep.mubr.bf16.mxu0 0
    %428 = vmatmul.mubr.bf16.gmra.mrb[0].mxu0 %v393
    %v429 = vpop.f32.mrb[0].mxu0
    %v430 = vadd.f32 0.0, %v429
    %v431 = vpop.f32.mrb[0].mxu0
    %v432 = vpop.f32.mrb[0].mxu0
    %v433 = vpop.f32.mrb[0].mxu0
    %434 = vdwg.mxu0
    %435 = vmatprep.subr.bf16.mxu0 0
    %436 = vmatpush1.bf16.msra.mxu0 %v270
    %437 = vmatprep.subr.bf16.mxu0 0
    %438 = vmatpush1.bf16.msra.mxu0 0
    %439 = vmatprep.subr.bf16.mxu0 0
    %440 = vmatpush1.bf16.msra.mxu0 0
    %441 = vmatprep.subr.bf16.mxu0 0
    %442 = vmatpush1.bf16.msra.mxu0 0
    %443 = vmatprep.subr.bf16.mxu0 0
    %444 = vmatpush1.bf16.msra.mxu0 0
    %445 = vmatprep.subr.bf16.mxu0 0
    %446 = vmatpush1.bf16.msra.mxu0 0
    %447 = vmatprep.subr.bf16.mxu0 0
    %448 = vmatpush1.bf16.msra.mxu0 0
    %449 = vmatprep.subr.bf16.mxu0 0
    %450 = vmatpush1.bf16.msra.mxu0 0
    %451 = vmatprep.subr.bf16.mxu0 0
    %452 = vmatpush1.bf16.msra.mxu0 0
    %453 = vmatprep.subr.bf16.mxu0 0
    %454 = vmatpush1.bf16.msra.mxu0 0
    %455 = vmatprep.subr.bf16.mxu0 0
    %456 = vmatpush1.bf16.msra.mxu0 0
    %457 = vmatprep.subr.bf16.mxu0 0
    %458 = vmatpush1.bf16.msra.mxu0 0
    %459 = vmatprep.subr.bf16.mxu0 0
    %460 = vmatpush1.bf16.msra.mxu0 0
    %461 = vmatprep.subr.bf16.mxu0 0
    %462 = vmatpush1.bf16.msra.mxu0 0
    %463 = vmatprep.subr.bf16.mxu0 0
    %464 = vmatpush1.bf16.msra.mxu0 0
    %465 = vmatprep.subr.bf16.mxu0 0
    %466 = vmatpush1.bf16.msra.mxu0 0
    %467 = vmatprep.mubr.bf16.mxu0 0
    %468 = vmatmul.mubr.bf16.gmra.mrb[0].mxu0 %v393
    %v469 = vpop.f32.mrb[0].mxu0
    %v470 = vadd.f32 0.0, %v469
    %v471 = vpop.f32.mrb[0].mxu0
    %v472 = vpop.f32.mrb[0].mxu0
    %v473 = vpop.f32.mrb[0].mxu0
    %474 = vdwg.mxu0
    %v475 = vadd.f32 %v158, %v430
    %v476 = vadd.f32 %v201, %v470
    %v479 = vunpack.c.l.s4 1983009808
    %v480 = vunpack.c.0.s8 %v479
    %v481 = vlaneseq
    %v482 = vshrl.u32 %v481, 7
    %v483 = vsub.s32 %v480, %v482
    %v484 = vrot.slane %v21, %v483
    %485 = vrot.lane.b32.xlu0 %v484, 127
    %v486 = vpop.permute.xlu0 %485
    %v488 = vsel %vm30, %v486, 0
    %490 = vmatprep.subr.bf16.mxu0 0
    %491 = vmatpush1.bf16.msra.mxu0 %v488
    %492 = vmatprep.subr.bf16.mxu0 0
    %493 = vmatpush1.bf16.msra.mxu0 0
    %494 = vmatprep.subr.bf16.mxu0 0
    %495 = vmatpush1.bf16.msra.mxu0 0
    %496 = vmatprep.subr.bf16.mxu0 0
    %497 = vmatpush1.bf16.msra.mxu0 0
    %498 = vmatprep.subr.bf16.mxu0 0
    %499 = vmatpush1.bf16.msra.mxu0 0
    %500 = vmatprep.subr.bf16.mxu0 0
    %501 = vmatpush1.bf16.msra.mxu0 0
    %502 = vmatprep.subr.bf16.mxu0 0
    %503 = vmatpush1.bf16.msra.mxu0 0
    %504 = vmatprep.subr.bf16.mxu0 0
    %505 = vmatpush1.bf16.msra.mxu0 0
    %506 = vmatprep.subr.bf16.mxu0 0
    %507 = vmatpush1.bf16.msra.mxu0 0
    %508 = vmatprep.subr.bf16.mxu0 0
    %509 = vmatpush1.bf16.msra.mxu0 0
    %510 = vmatprep.subr.bf16.mxu0 0
    %511 = vmatpush1.bf16.msra.mxu0 0
    %512 = vmatprep.subr.bf16.mxu0 0
    %513 = vmatpush1.bf16.msra.mxu0 0
    %514 = vmatprep.subr.bf16.mxu0 0
    %515 = vmatpush1.bf16.msra.mxu0 0
    %516 = vmatprep.subr.bf16.mxu0 0
    %517 = vmatpush1.bf16.msra.mxu0 0
    %518 = vmatprep.subr.bf16.mxu0 0
    %519 = vmatpush1.bf16.msra.mxu0 0
    %520 = vmatprep.subr.bf16.mxu0 0
    %521 = vmatpush1.bf16.msra.mxu0 0
    %522 = vmatprep.mubr.bf16.mxu0 0
    %523 = vmatmul.mubr.bf16.gmra.mrb[0].mxu0 %v393
    %v524 = vpop.f32.mrb[0].mxu0
    %v525 = vadd.f32 0.0, %v524
    %v526 = vpop.f32.mrb[0].mxu0
    %v527 = vpop.f32.mrb[0].mxu0
    %v528 = vpop.f32.mrb[0].mxu0
    %529 = vdwg.mxu0
    %v532 = vunpack.c.l.s4 1983009808
    %v533 = vunpack.c.0.s8 %v532
    %v534 = vlaneseq
    %v535 = vshrl.u32 %v534, 7
    %v536 = vsub.s32 %v533, %v535
    %v537 = vrot.slane %v22, %v536
    %538 = vrot.lane.b32.xlu0 %v537, 127
    %v539 = vpop.permute.xlu0 %538
    %v541 = vsel %vm30, %v539, 0
    %543 = vmatprep.subr.bf16.mxu0 0
    %544 = vmatpush1.bf16.msra.mxu0 %v541
    %545 = vmatprep.subr.bf16.mxu0 0
    %546 = vmatpush1.bf16.msra.mxu0 0
    %547 = vmatprep.subr.bf16.mxu0 0
    %548 = vmatpush1.bf16.msra.mxu0 0
    %549 = vmatprep.subr.bf16.mxu0 0
    %550 = vmatpush1.bf16.msra.mxu0 0
    %551 = vmatprep.subr.bf16.mxu0 0
    %552 = vmatpush1.bf16.msra.mxu0 0
    %553 = vmatprep.subr.bf16.mxu0 0
    %554 = vmatpush1.bf16.msra.mxu0 0
    %555 = vmatprep.subr.bf16.mxu0 0
    %556 = vmatpush1.bf16.msra.mxu0 0
    %557 = vmatprep.subr.bf16.mxu0 0
    %558 = vmatpush1.bf16.msra.mxu0 0
    %559 = vmatprep.subr.bf16.mxu0 0
    %560 = vmatpush1.bf16.msra.mxu0 0
    %561 = vmatprep.subr.bf16.mxu0 0
    %562 = vmatpush1.bf16.msra.mxu0 0
    %563 = vmatprep.subr.bf16.mxu0 0
    %564 = vmatpush1.bf16.msra.mxu0 0
    %565 = vmatprep.subr.bf16.mxu0 0
    %566 = vmatpush1.bf16.msra.mxu0 0
    %567 = vmatprep.subr.bf16.mxu0 0
    %568 = vmatpush1.bf16.msra.mxu0 0
    %569 = vmatprep.subr.bf16.mxu0 0
    %570 = vmatpush1.bf16.msra.mxu0 0
    %571 = vmatprep.subr.bf16.mxu0 0
    %572 = vmatpush1.bf16.msra.mxu0 0
    %573 = vmatprep.subr.bf16.mxu0 0
    %574 = vmatpush1.bf16.msra.mxu0 0
    %575 = vmatprep.mubr.bf16.mxu0 0
    %576 = vmatmul.mubr.bf16.gmra.mrb[0].mxu0 %v393
    %v577 = vpop.f32.mrb[0].mxu0
    %v578 = vadd.f32 0.0, %v577
    %v579 = vpop.f32.mrb[0].mxu0
    %v580 = vpop.f32.mrb[0].mxu0
    %v581 = vpop.f32.mrb[0].mxu0
    %582 = vdwg.mxu0
    %v583 = vadd.f32 %v347, %v525
    %v584 = vadd.f32 %v387, %v578
    %vm585 = vcmask 64512
    %v586 = vsel %vm585, %v475, 0.0
    %587 = vadd.xlane.f32.xlu0 %v586
    %v588 = vpop.xlane.xlu0 %587
    %v589 = vsel %vm585, %v476, 0.0
    %590 = vadd.xlane.f32.xlu0 %v589
    %v591 = vpop.xlane.xlu0 %590
    %v592 = vadd.f32 %v588, %v591
    %v593 = vsel %vm585, %v583, 0.0
    %594 = vadd.xlane.f32.xlu0 %v593
    %v595 = vpop.xlane.xlu0 %594
    %v596 = vsel %vm585, %v584, 0.0
    %597 = vadd.xlane.f32.xlu0 %v596
    %v598 = vpop.xlane.xlu0 %597
    %v599 = vadd.f32 %v595, %v598
    %v600 = vadd.f32 %v592, %v599
    %v601 = vmul.f32 %v475, %v475
    %v602 = vmul.f32 %v476, %v476
    %v603 = vsel %vm585, %v601, 0.0
    %604 = vadd.xlane.f32.xlu0 %v603
    %v605 = vpop.xlane.xlu0 %604
    %v606 = vsel %vm585, %v602, 0.0
    %607 = vadd.xlane.f32.xlu0 %v606
    %v608 = vpop.xlane.xlu0 %607
    %v609 = vadd.f32 %v605, %v608
    %v610 = vmul.f32 %v583, %v583
    %v611 = vmul.f32 %v584, %v584
    %v612 = vsel %vm585, %v610, 0.0
    %613 = vadd.xlane.f32.xlu0 %v612
    %v614 = vpop.xlane.xlu0 %613
    %v615 = vsel %vm585, %v611, 0.0
    %616 = vadd.xlane.f32.xlu0 %v615
    %v617 = vpop.xlane.xlu0 %616
    %v618 = vadd.f32 %v614, %v617
    %v619 = vadd.f32 %v609, %v618
    %v620 = vmul.f32 %v600, 0.03125
    %v621 = vmul.f32 %v619, 0.03125
    %v622 = vmul.f32 %v620, %v620
    %v623 = vsub.f32 %v621, %v622
    %v624 = vmax.f32 %v623, 0.0
    %v625 = vld [vmem:[%s2] sm:$0xff]
    %v626 = vadd.f32 %v624, 1e-05
    %v627 = vrsqrt.pop %v626
    %v628 = vmul.f32 %v625, %v627
    %v629 = vld [vmem:[%s3] sm:$0xff]
    %v630 = vmul.f32 %v620, %v628
    %v631 = vsub.f32 %v629, %v630
    %633 = vset.pattern.permute.xlu0 0
    %634 = vperm.xlu0 %633, %v628
    %v635 = vpop.permute.xlu0 %634
    %v637 = vmul.f32 %v475, %v635
    %v638 = vmul.f32 %v476, %v635
    %640 = vset.pattern.permute.xlu0 0
    %641 = vperm.xlu0 %640, %v631
    %v642 = vpop.permute.xlu0 %641
    %v644 = vadd.f32 %v637, %v642
    %v645 = vadd.f32 %v638, %v642
    %v646 = vmul.f32 %v583, %v635
    %v647 = vmul.f32 %v584, %v635
    %v648 = vadd.f32 %v646, %v642
    %v649 = vadd.f32 %v647, %v642
    %v650 = vmax.f32 %v644, %v648
    %v651 = vmax.f32 %v645, %v649
    %vm652 = vcmp.gt.f32.partialorder %v650, 0.0
    %vm653 = vcmp.gt.f32.partialorder %v651, 0.0
    %v654 = vmul.f32 %v650, 1.442695
    %v655 = vpow.pop %v654
    %v656 = vmul.f32 %v651, 1.442695
    %v657 = vpow.pop %v656
    %v658 = vsub.f32 %v655, 1.0
    %v659 = vsub.f32 %v657, 1.0
    %v660 = vsel %vm652, %v650, %v658
    %v661 = vsel %vm653, %v651, %v659
    %662 = vst.msk [vmem:[#allocation2] sm:$0xff] %vm585, %v660
    %663 = vst.msk [vmem:[#allocation2 + $0x8] sm:$0xff] %vm585, %v661
    // Predicated region
    $region18: #{_lambda_.1} parent=1 // pred_check
      _
    $region19: #{_lambda_.1} parent=1 // pred_check_branch
      %665 = sbr.rel (0) target = $region21
    $region20: #{_lambda_.1} parent=1 // pred_region
      %s667 = ssub.s32 256, 256
      %668 = vsyncadd [#allocation3], %s667
      %s669 = sshll.u32 [#allocation2], 4
      %s670 = int_to_ptr.vmem [resolvable:$true] %s669
      %675 = dma.vmem_to_hbm [thread:$0]  %s670, 256, %s4, [#allocation3], 128, 128, 8
    $region21: #{_lambda_.1} parent=1 // pred_fallthru
      _
    // Predicated region
    $region22: #{_lambda_.1} parent=1 // pred_check
      _
    $region23: #{_lambda_.1} parent=1 // pred_check_branch
      %677 = sbr.rel (0) target = $region25
    $region24: #{_lambda_.1} parent=1 // pred_region
      %678 = dma.done [#allocation3], 256
    $region25: #{_lambda_.1} parent=1 // pred_fallthru
      _
    %679 = vsyncpa [#allocation3], 1

</llo_original>
